<compile_context>
chip_gen: v7x
topology: tpu7x:2x2x1
jax: 0.10.0
libtpu: 0.0.40
codegen_flags: <defaults>
</compile_context>

<pallas_src>
import functools

import jax
import jax.numpy as jnp
from jax.experimental import pallas as pl
from jax.experimental.pallas import tpu as pltpu


def _round_up(a: int, b: int) -> int:
    return ((a + b - 1) // b) * b


def _device_kind() -> str:
    try:
        return jax.devices()[0].device_kind.lower()
    except Exception:
        return ""


def _vmem_capacity_bytes(kind: str) -> int:
    try:
        cap = getattr(pltpu.get_tpu_info(), "vmem_capacity_bytes", None)
        if cap:
            return int(cap)
    except Exception:
        pass
    return (64 << 20) if "v7" in kind else (128 << 20)


def _default_tiles(kind: str):
    if "v7" in kind:
        return 512, 256    # 64 MiB VMEM/TC -> smaller weight chunks
    if "v6" in kind:
        return 1024, 512   # worst flops:HBM ratio -> largest row tile
    if "v5" in kind:
        return 512, 1024   # 1 vst slot -> large tf cuts accumulator RMW traffic
    return 512, 512


def _pick_tiles(M, d_model, d_ff, x_dtype, w_dtype, out_dtype,
                tm_target, tf_target, budget):
    ix = jnp.dtype(x_dtype).itemsize
    iw = jnp.dtype(w_dtype).itemsize
    io = jnp.dtype(out_dtype).itemsize
    sub = max(8, 32 // ix)  # dtype-packed sublane (8 f32, 16 bf16, 32 int8)

    # tf candidates: lane-aligned divisors of d_ff, plus d_ff itself (a
    # full-extent block needs no alignment).  Avoids in-jit weight padding.
    tf_cands = sorted({t for t in range(128, d_ff + 1, 128) if d_ff % t == 0}
                      | {d_ff})

    def tf_at_most(v):
        fits = [t for t in tf_cands if t <= v]
        return fits[-1] if fits else tf_cands[0]

    tm_eff = _round_up(min(max(tm_target, sub), _round_up(M, sub)), sub)
    # Megacore: keep >= 2 row tiles when there is enough work so the second
    # TensorCore (v7x) is not idle.
    if M >= 512 and _round_up(M, tm_eff) // tm_eff < 2:
        tm_eff = _round_up((M + 1) // 2, sub)
    tf_eff = tf_at_most(tf_target)

    def tile_bytes(tm, tf):
        return (2 * tm * d_model * ix          # x tile (double-buffered)
                + 2 * d_model * tf * iw        # W1 chunk
                + 2 * tf * 4                   # b1 chunk
                + 2 * tf * d_model * iw        # W2 chunk
                + 2 * d_model * 4              # b2
                + 2 * tm * d_model * io        # out tile
                + tm * d_model * 4             # f32 accumulator
                + tm * tf * (4 + iw))          # intermediate h (f32 + cast)

    # Shrink tf first (not below 256), then tm (not below 256), then the rest,
    # until the double-buffered working set fits the per-core VMEM budget.
    while tile_bytes(tm_eff, tf_eff) > budget:
        if tf_eff > max(256, tf_cands[0]):
            tf_eff = tf_at_most(tf_eff // 2)
        elif tm_eff > 256:
            tm_eff = max(sub, _round_up(tm_eff // 2, sub))
        elif tf_eff > tf_cands[0]:
            tf_eff = tf_at_most(tf_eff // 2)
        elif tm_eff > sub:
            tm_eff = max(sub, _round_up(tm_eff // 2, sub))
        else:
            break

    m_pad = _round_up(M, tm_eff)
    return tm_eff, tf_eff, m_pad


def _ffn_kernel(x_ref, w1_ref, b1_ref, w2_ref, b2_ref, o_ref, acc_ref, *,
                nk_steps):
    # x_ref  : (tm, d_model)   resident across the tf axis
    # w1_ref : (d_model, tf)   streaming chunk of W1
    # b1_ref : (1, tf)         streaming chunk of b1
    # w2_ref : (tf, d_model)   streaming chunk of W2
    # b2_ref : (1, d_model)
    # o_ref  : (tm, d_model)
    # acc_ref: (tm, d_model)   f32 accumulator, persists across the tf axis

    # Linear 1 chunk (f32 MXU accumulation) + bias + ReLU + cast in one
    # expression so the (tm, tf) intermediate is stored at the MXU input dtype.
    h = jnp.dot(x_ref[...], w1_ref[...], preferred_element_type=jnp.float32)
    h = jnp.maximum(h + b1_ref[...], 0.0).astype(w2_ref.dtype)

    # Dropout = identity (inference mode).
    # TODO(synk): training-mode dropout (prng mask + 1/(1-p) rescale).

    # Partial Linear 2 contribution of this tf chunk.
    y_part = jnp.dot(h, w2_ref[...], preferred_element_type=jnp.float32)

    if nk_steps == 1:
        # Single-step reduction: no accumulator round-trip at all.
        o_ref[...] = (y_part + b2_ref[...]).astype(o_ref.dtype)
        return

    k = pl.program_id(1)

    @pl.when(k == 0)
    def _():
        acc_ref[...] = y_part                      # first step: plain write

    @pl.when(jnp.logical_and(k > 0, k < nk_steps - 1))
    def _():
        acc_ref[...] += y_part

    @pl.when(k == nk_steps - 1)
    def _():
        # Fused epilogue: no extra acc store+reload on the last step.
        o_ref[...] = (acc_ref[...] + y_part + b2_ref[...]).astype(o_ref.dtype)


@functools.partial(jax.jit, static_argnames=("tm", "tf", "compute_dtype"))
def feed_forward_block(x, w1, b1, w2, b2, *, tm=None, tf=None,
                       compute_dtype=None):
    """x: (batch, seq_len, d_model) -> (batch, seq_len, d_model)."""
    batch, seq_len, d_model = x.shape
    d_ff = w1.shape[1]
    M = batch * seq_len
    out_dtype = x.dtype

    # Optional bf16 compute path: cast x/W1/W2 at the boundary, keep f32
    # MXU accumulation (biases stay f32 and are added onto f32).
    if compute_dtype is not None:
        cdt = jnp.dtype(compute_dtype)
        x, w1, w2 = x.astype(cdt), w1.astype(cdt), w2.astype(cdt)

    kind = _device_kind()
    tm_t, tf_t = _default_tiles(kind)
    if tm is not None:
        tm_t = tm
    if tf is not None:
        tf_t = tf
    # Respect physical VMEM per core (64 MiB on v7x) with ~25% headroom;
    # tile_bytes already counts the double buffers.
    budget = int(0.75 * _vmem_capacity_bytes(kind))

    tm_eff, tf_eff, m_pad = _pick_tiles(
        M, d_model, d_ff, x.dtype, w1.dtype, out_dtype, tm_t, tf_t, budget)

    x2d = x.reshape(M, d_model)
    if m_pad != M:
        x2d = jnp.pad(x2d, ((0, m_pad - M), (0, 0)))   # activations only
    b1_2d = b1.reshape(1, d_ff)
    b2_2d = b2.reshape(1, d_model)

    grid = (m_pad // tm_eff, d_ff // tf_eff)

    flops = 4 * M * d_model * d_ff                     # two matmuls
    ix = x2d.dtype.itemsize
    bytes_accessed = int(
        m_pad * d_model * ix                                   # x read
        + m_pad * d_model * jnp.dtype(out_dtype).itemsize      # out write
        + grid[0] * (w1.size * w1.dtype.itemsize               # weights are
                     + b1.size * b1.dtype.itemsize             # re-streamed
                     + w2.size * w2.dtype.itemsize)            # per M tile
        + b2.size * b2.dtype.itemsize)

    out2d = pl.pallas_call(
        functools.partial(_ffn_kernel, nk_steps=grid[1]),
        out_shape=jax.ShapeDtypeStruct((m_pad, d_model), out_dtype),
        grid_spec=pltpu.PrefetchScalarGridSpec(
            num_scalar_prefetch=0,
            grid=grid,
            in_specs=[
                pl.BlockSpec((tm_eff, d_model), lambda i, k: (i, 0)),  # x (resident over k)
                pl.BlockSpec((d_model, tf_eff), lambda i, k: (0, k)),  # W1 chunk
                pl.BlockSpec((1, tf_eff), lambda i, k: (0, k)),        # b1 chunk
                pl.BlockSpec((tf_eff, d_model), lambda i, k: (k, 0)),  # W2 chunk
                pl.BlockSpec((1, d_model), lambda i, k: (0, 0)),       # b2
            ],
            out_specs=pl.BlockSpec((tm_eff, d_model), lambda i, k: (i, 0)),
            scratch_shapes=[pltpu.VMEM((tm_eff, d_model), jnp.float32)],
        ),
        compiler_params=pltpu.CompilerParams(
            dimension_semantics=("parallel", "arbitrary"),
            vmem_limit_bytes=int(budget),
        ),
        cost_estimate=pl.CostEstimate(
            flops=flops, transcendentals=0, bytes_accessed=bytes_accessed),
    )(x2d, w1, b1_2d, w2, b2_2d)

    return out2d[:M].reshape(batch, seq_len, d_model)


def init_params(key, d_model, d_ff, dtype=jnp.float32):
    """Deterministic init mirroring nn.Linear's U(-1/sqrt(fan_in), 1/sqrt(fan_in))."""
    k1, k2, k3, k4 = jax.random.split(key, 4)
    lim1 = 1.0 / (d_model ** 0.5)
    lim2 = 1.0 / (d_ff ** 0.5)
    # Stored as (in_features, out_features) so the kernel computes x @ W.
    w1 = jax.random.uniform(k1, (d_model, d_ff), dtype, -lim1, lim1)
    b1 = jax.random.uniform(k2, (d_ff,), dtype, -lim1, lim1)
    w2 = jax.random.uniform(k3, (d_ff, d_model), dtype, -lim2, lim2)
    b2 = jax.random.uniform(k4, (d_model,), dtype, -lim2, lim2)
    return w1, b1, w2, b2


if __name__ == "__main__":
    key = jax.random.PRNGKey(0)
    kx, kp, kx2, kp2 = jax.random.split(key, 4)

    # Small FFN (single M tile, single k step, d_model < 128 full-extent blocks).
    batch, seq_len, d_model, d_ff = 2, 8, 32, 64
    x = jax.random.normal(kx, (batch, seq_len, d_model), jnp.float32)
    w1, b1, w2, b2 = init_params(kp, d_model, d_ff)
    out = jax.block_until_ready(feed_forward_block(x, w1, b1, w2, b2))
    ref = jnp.maximum(x @ w1 + b1, 0.0) @ w2 + b2
    assert out.shape == (batch, seq_len, d_model)
    assert jnp.allclose(out, ref, atol=1e-5, rtol=1e-5)

    # Larger FFN exercising the multi-row-tile + multi-k accumulator path.
    b2_, s2_, dm2, dff2 = 2, 128, 128, 512
    x2 = jax.random.normal(kx2, (b2_, s2_, dm2), jnp.float32)
    w1b, b1b, w2b, b2b = init_params(kp2, dm2, dff2)
    out2 = jax.block_until_ready(
        feed_forward_block(x2, w1b, b1b, w2b, b2b, tm=128, tf=128))
    ref2 = jnp.maximum(x2 @ w1b + b1b, 0.0) @ w2b + b2b
    assert jnp.allclose(out2, ref2, atol=1e-4, rtol=1e-4)

    # bf16 compute path (f32 params cast at the boundary, f32 accumulation).
    out3 = jax.block_until_ready(
        feed_forward_block(x2, w1b, b1b, w2b, b2b, tm=128, tf=128,
                           compute_dtype=jnp.bfloat16))
    assert jnp.allclose(out3, ref2, atol=5e-2, rtol=5e-2)

    print("KERNEL_OK")
</pallas_src>

<mosaic_0001>
module attributes {stable_mosaic.version = 11 : i64} {
  func.func @_ffn_kernel(%arg0: i32, %arg1: i32, %arg2: memref<16x32xf32, #tpu.memory_space<vmem>>, %arg3: memref<32x64xf32, #tpu.memory_space<vmem>>, %arg4: memref<1x64xf32, #tpu.memory_space<vmem>>, %arg5: memref<64x32xf32, #tpu.memory_space<vmem>>, %arg6: memref<1x32xf32, #tpu.memory_space<vmem>>, %arg7: memref<16x32xf32, #tpu.memory_space<vmem>>, %arg8: memref<16x32xf32, #tpu.memory_space<vmem>>) attributes {dimension_semantics = [#tpu.dimension_semantics<parallel>, #tpu.dimension_semantics<arbitrary>], iteration_bounds = array<i64: 1, 1>, scalar_prefetch = 0 : i64, scratch_operands = 1 : i64, tpu.core_type = #tpu.core_type<tc>, window_params = [{transform_indices = @transform_0, window_bounds = array<i64: 16, 32>}, {transform_indices = @transform_1, window_bounds = array<i64: 32, 64>}, {transform_indices = @transform_2, window_bounds = array<i64: 1, 64>}, {transform_indices = @transform_3, window_bounds = array<i64: 64, 32>}, {pipeline_mode = #tpu.pipeline_mode<synchronous>, transform_indices = @transform_4, window_bounds = array<i64: 1, 32>}, {transform_indices = @transform_5, window_bounds = array<i64: 16, 32>}]} {
    %c0 = arith.constant 0 : index
    %c0_0 = arith.constant 0 : index
    %0 = vector.load %arg2[%c0, %c0_0] : memref<16x32xf32, #tpu.memory_space<vmem>>, vector<16x32xf32>
    %c0_1 = arith.constant 0 : index
    %c0_2 = arith.constant 0 : index
    %1 = vector.load %arg3[%c0_1, %c0_2] : memref<32x64xf32, #tpu.memory_space<vmem>>, vector<32x64xf32>
    %cst = arith.constant dense<0.000000e+00> : vector<16x64xf32>
    %2 = tpu.matmul %0, %1, %cst {dimension_numbers = #tpu.dot_dimension_numbers<[1], [0], [0], [1], [0, 0, 1, 1], [], []>} : vector<16x32xf32>, vector<32x64xf32>, vector<16x64xf32> -> vector<16x64xf32>
    %c0_3 = arith.constant 0 : index
    %c0_4 = arith.constant 0 : index
    %3 = vector.load %arg4[%c0_3, %c0_4] : memref<1x64xf32, #tpu.memory_space<vmem>>, vector<1x64xf32>
    %4 = vector.broadcast %3 : vector<1x64xf32> to vector<16x64xf32>
    %5 = arith.addf %2, %4 : vector<16x64xf32>
    %cst_5 = arith.constant 0.000000e+00 : f32
    %6 = vector.broadcast %cst_5 : f32 to vector<16x64xf32>
    %7 = arith.maximumf %5, %6 : vector<16x64xf32>
    %c0_6 = arith.constant 0 : index
    %c0_7 = arith.constant 0 : index
    %8 = vector.load %arg5[%c0_6, %c0_7] : memref<64x32xf32, #tpu.memory_space<vmem>>, vector<64x32xf32>
    %cst_8 = arith.constant dense<0.000000e+00> : vector<16x32xf32>
    %9 = tpu.matmul %7, %8, %cst_8 {dimension_numbers = #tpu.dot_dimension_numbers<[1], [0], [0], [1], [0, 0, 1, 1], [], []>} : vector<16x64xf32>, vector<64x32xf32>, vector<16x32xf32> -> vector<16x32xf32>
    %c0_9 = arith.constant 0 : index
    %c0_10 = arith.constant 0 : index
    %10 = vector.load %arg6[%c0_9, %c0_10] : memref<1x32xf32, #tpu.memory_space<vmem>>, vector<1x32xf32>
    %11 = vector.broadcast %10 : vector<1x32xf32> to vector<16x32xf32>
    %12 = arith.addf %9, %11 : vector<16x32xf32>
    %c0_11 = arith.constant 0 : index
    %c0_12 = arith.constant 0 : index
    %13 = vector.load %arg7[%c0_11, %c0_12] : memref<16x32xf32, #tpu.memory_space<vmem>>, vector<16x32xf32>
    tpu.vector_store %arg7[%c0_11, %c0_12], %12 {strides = array<i32>} : memref<16x32xf32, #tpu.memory_space<vmem>>, vector<16x32xf32>,
    return
  }
  func.func @transform_0(%arg0: i32, %arg1: i32) -> (i32, i32) {
    %c0_i32 = arith.constant 0 : i32
    %c0_i32_0 = arith.constant 0 : i32
    return %arg0, %c0_i32 : i32, i32
  }
  func.func @transform_1(%arg0: i32, %arg1: i32) -> (i32, i32) {
    %c0_i32 = arith.constant 0 : i32
    %c0_i32_0 = arith.constant 0 : i32
    return %c0_i32, %arg1 : i32, i32
  }
  func.func @transform_2(%arg0: i32, %arg1: i32) -> (i32, i32) {
    %c0_i32 = arith.constant 0 : i32
    %c0_i32_0 = arith.constant 0 : i32
    return %c0_i32, %arg1 : i32, i32
  }
  func.func @transform_3(%arg0: i32, %arg1: i32) -> (i32, i32) {
    %c0_i32 = arith.constant 0 : i32
    %c0_i32_0 = arith.constant 0 : i32
    return %arg1, %c0_i32 : i32, i32
  }
  func.func @transform_4(%arg0: i32, %arg1: i32) -> (i32, i32) {
    %c0_i32 = arith.constant 0 : i32
    %c0_i32_0 = arith.constant 0 : i32
    %c0_i32_1 = arith.constant 0 : i32
    return %c0_i32, %c0_i32_0 : i32, i32
  }
  func.func @transform_5(%arg0: i32, %arg1: i32) -> (i32, i32) {
    %c0_i32 = arith.constant 0 : i32
    %c0_i32_0 = arith.constant 0 : i32
    return %arg0, %c0_i32 : i32, i32
  }
}

</mosaic_0001>

<llo_original>
// kernel: feed_forward_block.1
$region0: #{feed_forward_block.1}
  #allocation0 [shape = 'u32[]', space=smem, size = 0x4, offset = 0x4, fixed_abs, tag = 'smem constant byte address 0x4 - core index']
  #allocation1 [shape = 'u32[144,128]{1,0:T(1,128)}', space=vmem, size = 0x12000, scoped, tag = 'internal scratch']
  #allocation2 [shape = 'f32[16,32]{1,0:T(8,128)}', space=vmem, size = 0x2000, scoped, tag = 'scratch operand']
  %s0 = inlined_call_operand.hbm [shape: f32[16,32], index: 0, kind: input, shape index: {}]
  %s1 = inlined_call_operand.hbm [shape: f32[32,64], index: 1, kind: input, shape index: {}]
  %s2 = inlined_call_operand.hbm [shape: f32[1,64], index: 2, kind: input, shape index: {}]
  %s3 = inlined_call_operand.hbm [shape: f32[64,32], index: 3, kind: input, shape index: {}]
  %s4 = inlined_call_operand.hbm [shape: f32[1,32], index: 4, kind: input, shape index: {}]
  %s5 = inlined_call_operand.hbm [shape: f32[16,32], index: 5, kind: output, shape index: {}]
  %s6 = sld [smem:[#allocation0]]
  $region50: #{feed_forward_block.1} parent=0
    _
  %s8 = ssub.s32 1, %s6
  %s9 = scalar_select 0, %s8, %s6
  $region1: #{feed_forward_block.1} parent=0
    #allocation3 [shape = 'u8[8192]{0}', space=vmem, size = 0x2000, scoped, tag = 'input window, operand 0, single buffered']
    #allocation4 [shape = 's32[1]{0}', space=sflag, size = 0x4, scoped, tag = 'scoped memory for feed_forward_block.1']
    #allocation5 [shape = 's32[1]{0}', space=sflag, size = 0x4, scoped, tag = 'scoped memory for feed_forward_block.1']
    #allocation6 [shape = 'u8[16384]{0}', space=vmem, size = 0x4000, scoped, tag = 'input window, operand 1, single buffered']
    #allocation7 [shape = 's32[1]{0}', space=sflag, size = 0x4, scoped, tag = 'scoped memory for feed_forward_block.1']
    #allocation8 [shape = 'u8[512]{0}', space=vmem, size = 0x400, scoped, tag = 'input window, operand 2, single buffered']
    #allocation9 [shape = 'u8[32768]{0}', space=vmem, size = 0x8000, scoped, tag = 'input window, operand 3, single buffered']
    #allocation10 [shape = 's32[1]{0}', space=sflag, size = 0x4, scoped, tag = 'scoped memory for feed_forward_block.1']
    #allocation11 [shape = 'u8[512]{0}', space=vmem, size = 0x400, scoped, tag = 'input window, operand 4, single buffered']
    #allocation12 [shape = 'u8[8192]{0}', space=vmem, size = 0x2000, scoped, tag = 'output window, operand 0, single buffered']
    %10 = vsyncpa [#allocation4], 0
    %11 = vsyncpa [#allocation7], 0
    %12 = vsyncpa [#allocation10], 0
    %13 = vsyncpa [#allocation5], 0
    // Predicated region
    $region2: #{feed_forward_block.1} parent=1 // pred_check
      _
    $region3: #{feed_forward_block.1} parent=1 // pred_check_branch
      %15 = sbr.rel (0) target = $region5
    $region4: #{feed_forward_block.1} parent=1 // pred_region
      %s17 = ssub.s32 256, 256
      %18 = vsyncadd [#allocation4], %s17
      %s19 = sshll.u32 [#allocation3], 4
      %s20 = int_to_ptr.vmem [resolvable:$true] %s19
      %25 = dma.hbm_to_vmem [thread:$0]  %s0, 256, %s20, [#allocation4], 128, 128, 8
    $region5: #{feed_forward_block.1} parent=1 // pred_fallthru
      _
    // Predicated region
    $region6: #{feed_forward_block.1} parent=1 // pred_check
      _
    $region7: #{feed_forward_block.1} parent=1 // pred_check_branch
      %27 = sbr.rel (0) target = $region9
    $region8: #{feed_forward_block.1} parent=1 // pred_region
      %s29 = ssub.s32 512, 512
      %30 = vsyncadd [#allocation7], %s29
      %s31 = sshll.u32 [#allocation6], 4
      %s32 = int_to_ptr.vmem [resolvable:$true] %s31
      %37 = dma.hbm_to_vmem [thread:$0]  %s1, 512, %s32, [#allocation7], 128, 128, 8
    $region9: #{feed_forward_block.1} parent=1 // pred_fallthru
      _
    // Predicated region
    $region10: #{feed_forward_block.1} parent=1 // pred_check
      _
    $region11: #{feed_forward_block.1} parent=1 // pred_check_branch
      %39 = sbr.rel (0) target = $region13
    $region12: #{feed_forward_block.1} parent=1 // pred_region
      %s41 = ssub.s32 16, 16
      %42 = vsyncadd [#allocation7], %s41
      %s44 = sshll.u32 [#allocation8], 4
      %s45 = int_to_ptr.vmem [resolvable:$true] %s44
      %47 = dma.hbm_to_vmem [thread:$0]  %s2, 16, %s45, [#allocation7]
    $region13: #{feed_forward_block.1} parent=1 // pred_fallthru
      _
    // Predicated region
    $region14: #{feed_forward_block.1} parent=1 // pred_check
      _
    $region15: #{feed_forward_block.1} parent=1 // pred_check_branch
      %49 = sbr.rel (0) target = $region17
    $region16: #{feed_forward_block.1} parent=1 // pred_region
      %s51 = ssub.s32 1024, 1024
      %52 = vsyncadd [#allocation10], %s51
      %s53 = sshll.u32 [#allocation9], 4
      %s54 = int_to_ptr.vmem [resolvable:$true] %s53
      %59 = dma.hbm_to_vmem [thread:$0]  %s3, 1024, %s54, [#allocation10], 128, 128, 8
    $region17: #{feed_forward_block.1} parent=1 // pred_fallthru
      _
    // Predicated region
    $region18: #{feed_forward_block.1} parent=1 // pred_check
      _
    $region19: #{feed_forward_block.1} parent=1 // pred_check_branch
      %61 = sbr.rel (0) target = $region21
    $region20: #{feed_forward_block.1} parent=1 // pred_region
      %s63 = ssub.s32 16, 16
      %64 = vsyncadd [#allocation10], %s63
      %s66 = sshll.u32 [#allocation11], 4
      %s67 = int_to_ptr.vmem [resolvable:$true] %s66
      %69 = dma.hbm_to_vmem [thread:$0]  %s4, 16, %s67, [#allocation10]
    $region21: #{feed_forward_block.1} parent=1 // pred_fallthru
      _
    // Predicated region
    $region22: #{feed_forward_block.1} parent=1 // pred_check
      _
    $region23: #{feed_forward_block.1} parent=1 // pred_check_branch
      %71 = sbr.rel (0) target = $region25
    $region24: #{feed_forward_block.1} parent=1 // pred_region
      %72 = dma.done [#allocation4], 256
    $region25: #{feed_forward_block.1} parent=1 // pred_fallthru
      _
    // Predicated region
    $region26: #{feed_forward_block.1} parent=1 // pred_check
      _
    $region27: #{feed_forward_block.1} parent=1 // pred_check_branch
      %74 = sbr.rel (0) target = $region29
    $region28: #{feed_forward_block.1} parent=1 // pred_region
      %75 = dma.done [#allocation7], 512
    $region29: #{feed_forward_block.1} parent=1 // pred_fallthru
      _
    // Predicated region
    $region30: #{feed_forward_block.1} parent=1 // pred_check
      _
    $region31: #{feed_forward_block.1} parent=1 // pred_check_branch
      %77 = sbr.rel (0) target = $region33
    $region32: #{feed_forward_block.1} parent=1 // pred_region
      %78 = dma.done [#allocation7], 16
    $region33: #{feed_forward_block.1} parent=1 // pred_fallthru
      _
    // Predicated region
    $region34: #{feed_forward_block.1} parent=1 // pred_check
      _
    $region35: #{feed_forward_block.1} parent=1 // pred_check_branch
      %80 = sbr.rel (0) target = $region37
    $region36: #{feed_forward_block.1} parent=1 // pred_region
      %81 = dma.done [#allocation10], 1024
    $region37: #{feed_forward_block.1} parent=1 // pred_fallthru
      _
    // Predicated region
    $region38: #{feed_forward_block.1} parent=1 // pred_check
      _
    $region39: #{feed_forward_block.1} parent=1 // pred_check_branch
      %83 = sbr.rel (0) target = $region41
    $region40: #{feed_forward_block.1} parent=1 // pred_region
      %84 = dma.done [#allocation10], 16
    $region41: #{feed_forward_block.1} parent=1 // pred_fallthru
      _
    %v85 = vld [vmem:[#allocation3] sm:$0xff]
    %v86 = vld [vmem:[#allocation3 + $0x8] sm:$0xff]
    %v87 = vld [vmem:[#allocation6] sm:$0xff]
    %v88 = vld [vmem:[#allocation6 + $0x8] sm:$0xff]
    %v89 = vld [vmem:[#allocation6 + $0x10] sm:$0xff]
    %v90 = vld [vmem:[#allocation6 + $0x18] sm:$0xff]
    %v91 = vld [vmem:[#allocation8] sm:$0x1]
    %v93 = vlaneseq
    %v94 = vshrl.u32 %v93, 7
    %v95 = vsub.s32 0, %v94
    %v96 = vrot.slane %v91, %v95
    %vm98 = vcmask 261120
    %v100 = vsel %vm98, %v85, 0
    %v103 = vsel %vm98, %v86, 0
    %105 = vmatprep.subr.mxu0 0.0
    %106 = vmatpush1.msra.mxu0 %v87
    %107 = vmatprep.subr.mxu0 0.0
    %108 = vmatpush1.msra.mxu0 %v88
    %109 = vmatprep.subr.mxu0 0.0
    %110 = vmatpush1.msra.mxu0 %v89
    %111 = vmatprep.subr.mxu0 0.0
    %112 = vmatpush1.msra.mxu0 %v90
    %113 = vmatprep.subr.mxu0 0.0
    %114 = vmatpush1.msra.mxu0 0.0
    %115 = vmatprep.subr.mxu0 0.0
    %116 = vmatpush1.msra.mxu0 0.0
    %117 = vmatprep.subr.mxu0 0.0
    %118 = vmatpush1.msra.mxu0 0.0
    %119 = vmatprep.subr.mxu0 0.0
    %120 = vmatpush1.msra.mxu0 0.0
    %121 = vmatprep.subr.mxu0 0.0
    %122 = vmatpush1.msra.mxu0 0.0
    %123 = vmatprep.subr.mxu0 0.0
    %124 = vmatpush1.msra.mxu0 0.0
    %125 = vmatprep.subr.mxu0 0.0
    %126 = vmatpush1.msra.mxu0 0.0
    %127 = vmatprep.subr.mxu0 0.0
    %128 = vmatpush1.msra.mxu0 0.0
    %129 = vmatprep.subr.mxu0 0.0
    %130 = vmatpush1.msra.mxu0 0.0
    %131 = vmatprep.subr.mxu0 0.0
    %132 = vmatpush1.msra.mxu0 0.0
    %133 = vmatprep.subr.mxu0 0.0
    %134 = vmatpush1.msra.mxu0 0.0
    %135 = vmatprep.subr.mxu0 0.0
    %136 = vmatpush1.msra.mxu0 0.0
    %137 = vmatprep.subr.mxu0 0.0
    %138 = vmatpush1.msra.mxu0 0.0
    %139 = vmatprep.subr.mxu0 0.0
    %140 = vmatpush1.msra.mxu0 0.0
    %141 = vmatprep.subr.mxu0 0.0
    %142 = vmatpush1.msra.mxu0 0.0
    %143 = vmatprep.subr.mxu0 0.0
    %144 = vmatpush1.msra.mxu0 0.0
    %145 = vmatprep.subr.mxu0 0.0
    %146 = vmatpush1.msra.mxu0 0.0
    %147 = vmatprep.subr.mxu0 0.0
    %148 = vmatpush1.msra.mxu0 0.0
    %149 = vmatprep.subr.mxu0 0.0
    %150 = vmatpush1.msra.mxu0 0.0
    %151 = vmatprep.subr.mxu0 0.0
    %152 = vmatpush1.msra.mxu0 0.0
    %153 = vmatprep.subr.mxu0 0.0
    %154 = vmatpush1.msra.mxu0 0.0
    %155 = vmatprep.subr.mxu0 0.0
    %156 = vmatpush1.msra.mxu0 0.0
    %157 = vmatprep.subr.mxu0 0.0
    %158 = vmatpush1.msra.mxu0 0.0
    %159 = vmatprep.subr.mxu0 0.0
    %160 = vmatpush1.msra.mxu0 0.0
    %161 = vmatprep.subr.mxu0 0.0
    %162 = vmatpush1.msra.mxu0 0.0
    %163 = vmatprep.subr.mxu0 0.0
    %164 = vmatpush1.msra.mxu0 0.0
    %165 = vmatprep.subr.mxu0 0.0
    %166 = vmatpush1.msra.mxu0 0.0
    %167 = vmatprep.subr.mxu0 0.0
    %168 = vmatpush1.msra.mxu0 0.0
    %169 = vmatprep.mubr.f32.mxu0 0.0
    %170 = vmatmul.mubr.f32.gmra.mrb[0].mxu0 %v100
    %v171 = vpop.f32.mrb[0].mxu0
    %v172 = vadd.f32 %v96, %v171
    %v173 = vpop.f32.mrb[0].mxu0
    %174 = vmatprep.mubr.f32.mxu0 0.0
    %175 = vmatmul.mubr.f32.gmra.mrb[0].mxu0 %v103
    %v176 = vpop.f32.mrb[0].mxu0
    %v177 = vadd.f32 %v96, %v176
    %v178 = vpop.f32.mrb[0].mxu0
    %179 = vdwg.mxu0
    %v180 = vmax.f32 %v172, 0.0
    %v181 = vmax.f32 %v177, 0.0
    %v182 = vld [vmem:[#allocation9] sm:$0xff]
    %v183 = vld [vmem:[#allocation9 + $0x8] sm:$0xff]
    %v184 = vld [vmem:[#allocation9 + $0x10] sm:$0xff]
    %v185 = vld [vmem:[#allocation9 + $0x18] sm:$0xff]
    %v186 = vld [vmem:[#allocation9 + $0x20] sm:$0xff]
    %v187 = vld [vmem:[#allocation9 + $0x28] sm:$0xff]
    %v188 = vld [vmem:[#allocation9 + $0x30] sm:$0xff]
    %v189 = vld [vmem:[#allocation9 + $0x38] sm:$0xff]
    %v190 = vld [vmem:[#allocation11] sm:$0x1]
    %v192 = vlaneseq
    %v193 = vshrl.u32 %v192, 7
    %v194 = vsub.s32 0, %v193
    %v195 = vrot.slane %v190, %v194
    %vm197 = vcmask 523264
    %v199 = vsel %vm197, %v180, 0
    %v202 = vsel %vm197, %v181, 0
    %204 = vmatprep.subr.mxu0 0.0
    %205 = vmatpush1.msra.mxu0 %v182
    %206 = vmatprep.subr.mxu0 0.0
    %207 = vmatpush1.msra.mxu0 %v183
    %208 = vmatprep.subr.mxu0 0.0
    %209 = vmatpush1.msra.mxu0 %v184
    %210 = vmatprep.subr.mxu0 0.0
    %211 = vmatpush1.msra.mxu0 %v185
    %212 = vmatprep.subr.mxu0 0.0
    %213 = vmatpush1.msra.mxu0 %v186
    %214 = vmatprep.subr.mxu0 0.0
    %215 = vmatpush1.msra.mxu0 %v187
    %216 = vmatprep.subr.mxu0 0.0
    %217 = vmatpush1.msra.mxu0 %v188
    %218 = vmatprep.subr.mxu0 0.0
    %219 = vmatpush1.msra.mxu0 %v189
    %220 = vmatprep.subr.mxu0 0.0
    %221 = vmatpush1.msra.mxu0 0.0
    %222 = vmatprep.subr.mxu0 0.0
    %223 = vmatpush1.msra.mxu0 0.0
    %224 = vmatprep.subr.mxu0 0.0
    %225 = vmatpush1.msra.mxu0 0.0
    %226 = vmatprep.subr.mxu0 0.0
    %227 = vmatpush1.msra.mxu0 0.0
    %228 = vmatprep.subr.mxu0 0.0
    %229 = vmatpush1.msra.mxu0 0.0
    %230 = vmatprep.subr.mxu0 0.0
    %231 = vmatpush1.msra.mxu0 0.0
    %232 = vmatprep.subr.mxu0 0.0
    %233 = vmatpush1.msra.mxu0 0.0
    %234 = vmatprep.subr.mxu0 0.0
    %235 = vmatpush1.msra.mxu0 0.0
    %236 = vmatprep.subr.mxu0 0.0
    %237 = vmatpush1.msra.mxu0 0.0
    %238 = vmatprep.subr.mxu0 0.0
    %239 = vmatpush1.msra.mxu0 0.0
    %240 = vmatprep.subr.mxu0 0.0
    %241 = vmatpush1.msra.mxu0 0.0
    %242 = vmatprep.subr.mxu0 0.0
    %243 = vmatpush1.msra.mxu0 0.0
    %244 = vmatprep.subr.mxu0 0.0
    %245 = vmatpush1.msra.mxu0 0.0
    %246 = vmatprep.subr.mxu0 0.0
    %247 = vmatpush1.msra.mxu0 0.0
    %248 = vmatprep.subr.mxu0 0.0
    %249 = vmatpush1.msra.mxu0 0.0
    %250 = vmatprep.subr.mxu0 0.0
    %251 = vmatpush1.msra.mxu0 0.0
    %252 = vmatprep.subr.mxu0 0.0
    %253 = vmatpush1.msra.mxu0 0.0
    %254 = vmatprep.subr.mxu0 0.0
    %255 = vmatpush1.msra.mxu0 0.0
    %256 = vmatprep.subr.mxu0 0.0
    %257 = vmatpush1.msra.mxu0 0.0
    %258 = vmatprep.subr.mxu0 0.0
    %259 = vmatpush1.msra.mxu0 0.0
    %260 = vmatprep.subr.mxu0 0.0
    %261 = vmatpush1.msra.mxu0 0.0
    %262 = vmatprep.subr.mxu0 0.0
    %263 = vmatpush1.msra.mxu0 0.0
    %264 = vmatprep.subr.mxu0 0.0
    %265 = vmatpush1.msra.mxu0 0.0
    %266 = vmatprep.subr.mxu0 0.0
    %267 = vmatpush1.msra.mxu0 0.0
    %268 = vmatprep.mubr.f32.mxu0 0.0
    %269 = vmatmul.mubr.f32.gmra.mrb[0].mxu0 %v199
    %v270 = vpop.f32.mrb[0].mxu0
    %v271 = vadd.f32 %v195, %v270
    %v272 = vpop.f32.mrb[0].mxu0
    %273 = vmatprep.mubr.f32.mxu0 0.0
    %274 = vmatmul.mubr.f32.gmra.mrb[0].mxu0 %v202
    %v275 = vpop.f32.mrb[0].mxu0
    %v276 = vadd.f32 %v195, %v275
    %v277 = vpop.f32.mrb[0].mxu0
    %278 = vdwg.mxu0
    %279 = vst.msk [vmem:[#allocation12] sm:$0xff] %vm98, %v271
    %280 = vst.msk [vmem:[#allocation12 + $0x8] sm:$0xff] %vm98, %v276
    // Predicated region
    $region42: #{feed_forward_block.1} parent=1 // pred_check
      _
    $region43: #{feed_forward_block.1} parent=1 // pred_check_branch
      %282 = sbr.rel (0) target = $region45
    $region44: #{feed_forward_block.1} parent=1 // pred_region
      %s284 = ssub.s32 256, 256
      %285 = vsyncadd [#allocation5], %s284
      %s286 = sshll.u32 [#allocation12], 4
      %s287 = int_to_ptr.vmem [resolvable:$true] %s286
      %292 = dma.vmem_to_hbm [thread:$0]  %s287, 256, %s5, [#allocation5], 128, 128, 8
    $region45: #{feed_forward_block.1} parent=1 // pred_fallthru
      _
    // Predicated region
    $region46: #{feed_forward_block.1} parent=1 // pred_check
      _
    $region47: #{feed_forward_block.1} parent=1 // pred_check_branch
      %294 = sbr.rel (0) target = $region49
    $region48: #{feed_forward_block.1} parent=1 // pred_region
      %295 = dma.done [#allocation5], 256
    $region49: #{feed_forward_block.1} parent=1 // pred_fallthru
      _
    %296 = vsyncpa [#allocation4], 1
    %297 = vsyncpa [#allocation7], 1
    %298 = vsyncpa [#allocation10], 1
    %299 = vsyncpa [#allocation5], 1

</llo_original>
